<compile_context>
chip_gen: v7x
topology: tpu7x:2x2x1
jax: 0.10.0
libtpu: 0.0.40
codegen_flags: <defaults>
</compile_context>

<pallas_src>
import functools

import jax
import jax.numpy as jnp
from jax.experimental import pallas as pl
from jax.experimental.pallas import tpu as pltpu


def _round_up(x, m):
    return (x + m - 1) // m * m


# --------------------------------------------------------------------------
# Kernel 1: 1x1-conv projections (q, k, v), tiled over (batch, pixel tile).
# --------------------------------------------------------------------------
def _proj_kernel(x_ref, wq_ref, bq_ref, wk_ref, bk_ref, wv_ref, bv_ref,
                 q_ref, k_ref, v_ref, *, compute_dtype):
    x = x_ref[0].astype(compute_dtype)                                 # (tn, Cp)
    q = jnp.dot(x, wq_ref[...], preferred_element_type=jnp.float32) + bq_ref[...]
    k = jnp.dot(x, wk_ref[...], preferred_element_type=jnp.float32) + bk_ref[...]
    v = jnp.dot(x, wv_ref[...], preferred_element_type=jnp.float32) + bv_ref[...]
    q_ref[0] = q.astype(q_ref.dtype)
    k_ref[0] = k.astype(k_ref.dtype)
    v_ref[0] = v.astype(v_ref.dtype)


# --------------------------------------------------------------------------
# Kernel 2: flash attention + residual, grid = (B, q_tiles, kv_tiles).
# --------------------------------------------------------------------------
def _flash_kernel(q_ref, k_ref, v_ref, x_ref, gamma_ref, out_ref,
                  m_ref, l_ref, acc_ref, *, n_valid, block_k, needs_mask,
                  approx):
    ki = pl.program_id(2)

    @pl.when(ki == 0)
    def _init():
        m_ref[...] = jnp.full_like(m_ref, -jnp.inf)
        l_ref[...] = jnp.zeros_like(l_ref)
        acc_ref[...] = jnp.zeros_like(acc_ref)

    q = q_ref[0]                                                       # (tq, Dqk)
    k = k_ref[0]                                                       # (tk, Dqk)
    # energy[i, j] = q_i . k_j  -- contract on last dims, no k.T relayout.
    s = jax.lax.dot_general(
        q, k, dimension_numbers=(((1,), (1,)), ((), ())),
        preferred_element_type=jnp.float32)                            # (tq, tk) f32

    if needs_mask:  # only emitted when N was padded up to the tile size
        col = jax.lax.broadcasted_iota(jnp.int32, s.shape, 1) + ki * block_k
        s = jnp.where(col < n_valid, s, -1e30)

    # Online softmax (statistics in f32).
    m_prev = m_ref[...]
    m_new = jnp.maximum(m_prev, jnp.max(s, axis=-1, keepdims=True))    # (tq, 1)
    alpha = jnp.exp(m_prev - m_new)
    p = jnp.exp(s - m_new)                                             # un-normalized
    l_ref[...] = alpha * l_ref[...] + jnp.sum(p, axis=-1, keepdims=True)
    acc_ref[...] = alpha * acc_ref[...] + jnp.dot(
        p.astype(v_ref.dtype), v_ref[0], preferred_element_type=jnp.float32)
    m_ref[...] = m_new

    @pl.when(ki == pl.num_programs(2) - 1)
    def _finalize():
        # Deferred normalization: one reciprocal per row instead of N divides.
        inv_l = pl.reciprocal(l_ref[...], approx=approx)               # (tq, 1)
        o = acc_ref[...] * inv_l                                       # (tq, Cp)
        out_ref[0] = (gamma_ref[0, 0] * o + x_ref[0]).astype(out_ref.dtype)


# --------------------------------------------------------------------------
# Wrapper
# --------------------------------------------------------------------------
def pam_forward(x_nchw, params, *, block_n=128, use_bf16=True,
                approx_recip=None):
    """x_nchw: (B, C, H, W) float32 -> (B, C, H, W) float32."""
    B, C, H, W = x_nchw.shape
    N = H * W
    C8 = params["wq"].shape[1]

    cdt = jnp.bfloat16 if use_bf16 else jnp.float32
    approx = use_bf16 if approx_recip is None else approx_recip

    Cp = _round_up(C, 128)          # lane-dense channel dim
    Dqk = _round_up(C8, 128)        # lane-dense query/key width
    Np = _round_up(N, block_n)      # pixel dim padded to the tile size

    # NCHW -> channels-last, spatially flattened (see TODO at top of file).
    x = jnp.transpose(x_nchw, (0, 2, 3, 1)).reshape(B, N, C)
    x_pad = jnp.pad(x, ((0, 0), (0, Np - N), (0, Cp - C)))

    # Zero-padded, lane-dense parameters (padding is mathematically a no-op).
    wq = jnp.pad(params["wq"], ((0, Cp - C), (0, Dqk - C8))).astype(cdt)
    wk = jnp.pad(params["wk"], ((0, Cp - C), (0, Dqk - C8))).astype(cdt)
    wv = jnp.pad(params["wv"], ((0, Cp - C), (0, Cp - C))).astype(cdt)
    bq = jnp.pad(params["bq"], ((0, 0), (0, Dqk - C8))).astype(jnp.float32)
    bk = jnp.pad(params["bk"], ((0, 0), (0, Dqk - C8))).astype(jnp.float32)
    bv = jnp.pad(params["bv"], ((0, 0), (0, Cp - C))).astype(jnp.float32)

    n_tiles = Np // block_n

    # ---- pass 1: projections (q/k/v computed exactly once per pixel) ------
    q_pad, k_pad, v_pad = pl.pallas_call(
        functools.partial(_proj_kernel, compute_dtype=cdt),
        out_shape=(
            jax.ShapeDtypeStruct((B, Np, Dqk), cdt),
            jax.ShapeDtypeStruct((B, Np, Dqk), cdt),
            jax.ShapeDtypeStruct((B, Np, Cp), cdt),
        ),
        grid=(B, n_tiles),
        in_specs=[
            pl.BlockSpec((1, block_n, Cp), lambda b, t: (b, t, 0)),    # x
            pl.BlockSpec((Cp, Dqk), lambda b, t: (0, 0)),              # Wq (resident)
            pl.BlockSpec((1, Dqk), lambda b, t: (0, 0)),               # bq
            pl.BlockSpec((Cp, Dqk), lambda b, t: (0, 0)),              # Wk
            pl.BlockSpec((1, Dqk), lambda b, t: (0, 0)),               # bk
            pl.BlockSpec((Cp, Cp), lambda b, t: (0, 0)),               # Wv
            pl.BlockSpec((1, Cp), lambda b, t: (0, 0)),                # bv
        ],
        out_specs=(
            pl.BlockSpec((1, block_n, Dqk), lambda b, t: (b, t, 0)),
            pl.BlockSpec((1, block_n, Dqk), lambda b, t: (b, t, 0)),
            pl.BlockSpec((1, block_n, Cp), lambda b, t: (b, t, 0)),
        ),
        compiler_params=pltpu.CompilerParams(
            dimension_semantics=("parallel", "parallel")),
    )(x_pad, wq, bq, wk, bk, wv, bv)

    # ---- pass 2: tiled flash attention + residual --------------------------
    out_pad = pl.pallas_call(
        functools.partial(_flash_kernel, n_valid=N, block_k=block_n,
                          needs_mask=(Np != N), approx=approx),
        out_shape=jax.ShapeDtypeStruct((B, Np, Cp), jnp.float32),
        grid=(B, n_tiles, n_tiles),                                    # kv axis last
        in_specs=[
            pl.BlockSpec((1, block_n, Dqk), lambda b, qi, ki: (b, qi, 0)),  # q
            pl.BlockSpec((1, block_n, Dqk), lambda b, qi, ki: (b, ki, 0)),  # k
            pl.BlockSpec((1, block_n, Cp), lambda b, qi, ki: (b, ki, 0)),   # v
            pl.BlockSpec((1, block_n, Cp), lambda b, qi, ki: (b, qi, 0)),   # x residual
            pl.BlockSpec(memory_space=pltpu.MemorySpace.SMEM),              # gamma
        ],
        out_specs=pl.BlockSpec((1, block_n, Cp), lambda b, qi, ki: (b, qi, 0)),
        scratch_shapes=[
            pltpu.VMEM((block_n, 1), jnp.float32),    # running row max
            pltpu.VMEM((block_n, 1), jnp.float32),    # running row sum
            pltpu.VMEM((block_n, Cp), jnp.float32),   # output accumulator
        ],
        compiler_params=pltpu.CompilerParams(
            dimension_semantics=("parallel", "parallel", "arbitrary")),
    )(q_pad, k_pad, v_pad, x_pad, params["gamma"])

    out = out_pad[:, :N, :C]
    return jnp.transpose(out.reshape(B, H, W, C), (0, 3, 1, 2))


# --------------------------------------------------------------------------
# Pure-JAX reference mirroring the torch forward pass (f32 throughout).
# --------------------------------------------------------------------------
def pam_reference(x_nchw, params):
    B, C, H, W = x_nchw.shape
    N = H * W
    x = jnp.transpose(x_nchw, (0, 2, 3, 1)).reshape(B, N, C)
    q = x @ params["wq"] + params["bq"]
    k = x @ params["wk"] + params["bk"]
    v = x @ params["wv"] + params["bv"]
    energy = jnp.einsum("bnc,bmc->bnm", q, k)
    attn = jax.nn.softmax(energy, axis=-1)
    o = jnp.einsum("bnm,bmc->bnc", attn, v)
    out = params["gamma"][0, 0] * o + x
    return jnp.transpose(out.reshape(B, H, W, C), (0, 3, 1, 2))


def init_pam_params(key, in_channels):
    """Shapes/init matching the torch module (xavier conv weights, uniform
    biases, gamma initialized to zero)."""
    c = in_channels
    c8 = in_channels // 8
    kq, kk, kv, kbq, kbk, kbv = jax.random.split(key, 6)

    def xavier(k, fan_in, fan_out):
        bound = (6.0 / (fan_in + fan_out)) ** 0.5
        return jax.random.uniform(k, (fan_in, fan_out), jnp.float32,
                                  minval=-bound, maxval=bound)

    def bias(k, fan_in, fan_out):
        bound = 1.0 / (fan_in ** 0.5)
        return jax.random.uniform(k, (1, fan_out), jnp.float32,
                                  minval=-bound, maxval=bound)

    return {
        "wq": xavier(kq, c, c8), "bq": bias(kbq, c, c8),
        "wk": xavier(kk, c, c8), "bk": bias(kbk, c, c8),
        "wv": xavier(kv, c, c),  "bv": bias(kbv, c, c),
        "gamma": jnp.zeros((1, 1), jnp.float32),
    }


if __name__ == "__main__":
    key = jax.random.PRNGKey(0)
    k_x, k_p, k_x2 = jax.random.split(key, 3)

    B, C, H, W = 2, 32, 16, 16           # N = 256 -> 2x2 flash tiles of 128
    x = jax.random.normal(k_x, (B, C, H, W), jnp.float32)
    params = init_pam_params(k_p, C)
    params_nz = dict(params, gamma=jnp.full((1, 1), 0.5, jnp.float32))

    ref = pam_reference(x, params_nz)

    # Exact path: f32 MXU operands + exact reciprocal -> tight tolerance.
    out_f32 = jax.block_until_ready(pam_forward(x, params_nz, use_bf16=False))
    assert jnp.allclose(out_f32, ref, atol=1e-4, rtol=1e-4)

    # Fast path: bf16 MXU operands + approx reciprocal (f32 softmax stats).
    out_bf16 = jax.block_until_ready(pam_forward(x, params_nz, use_bf16=True))
    rel_err = jnp.linalg.norm(out_bf16 - ref) / jnp.linalg.norm(ref)
    assert float(rel_err) < 1e-2

    # gamma == 0 (module default right after init): out == x.
    out0 = jax.block_until_ready(pam_forward(x, params, use_bf16=True))
    assert jnp.allclose(out0, x, atol=1e-6, rtol=1e-6)

    # Ragged spatial size exercising the N-padding / key-mask path.
    x2 = jax.random.normal(k_x2, (B, C, 12, 12), jnp.float32)   # N = 144
    out2 = jax.block_until_ready(pam_forward(x2, params_nz, use_bf16=False))
    ref2 = pam_reference(x2, params_nz)
    assert jnp.allclose(out2, ref2, atol=1e-4, rtol=1e-4)

    print("KERNEL_OK")
</pallas_src>

<mosaic_0001>
module attributes {stable_mosaic.version = 11 : i64} {
  func.func @_proj_kernel(%arg0: i32, %arg1: i32, %arg2: memref<1x128x128xf32, #tpu.memory_space<vmem>>, %arg3: memref<128x128xf32, #tpu.memory_space<vmem>>, %arg4: memref<1x128xf32, #tpu.memory_space<vmem>>, %arg5: memref<128x128xf32, #tpu.memory_space<vmem>>, %arg6: memref<1x128xf32, #tpu.memory_space<vmem>>, %arg7: memref<128x128xf32, #tpu.memory_space<vmem>>, %arg8: memref<1x128xf32, #tpu.memory_space<vmem>>, %arg9: memref<1x128x128xf32, #tpu.memory_space<vmem>>, %arg10: memref<1x128x128xf32, #tpu.memory_space<vmem>>, %arg11: memref<1x128x128xf32, #tpu.memory_space<vmem>>) attributes {dimension_semantics = [#tpu.dimension_semantics<parallel>, #tpu.dimension_semantics<parallel>], iteration_bounds = array<i64: 2, 2>, scalar_prefetch = 0 : i64, scratch_operands = 0 : i64, tpu.core_type = #tpu.core_type<tc>, window_params = [{transform_indices = @transform_0, window_bounds = array<i64: 1, 128, 128>}, {pipeline_mode = #tpu.pipeline_mode<synchronous>, transform_indices = @transform_1, window_bounds = array<i64: 128, 128>}, {pipeline_mode = #tpu.pipeline_mode<synchronous>, transform_indices = @transform_2, window_bounds = array<i64: 1, 128>}, {pipeline_mode = #tpu.pipeline_mode<synchronous>, transform_indices = @transform_3, window_bounds = array<i64: 128, 128>}, {pipeline_mode = #tpu.pipeline_mode<synchronous>, transform_indices = @transform_4, window_bounds = array<i64: 1, 128>}, {pipeline_mode = #tpu.pipeline_mode<synchronous>, transform_indices = @transform_5, window_bounds = array<i64: 128, 128>}, {pipeline_mode = #tpu.pipeline_mode<synchronous>, transform_indices = @transform_6, window_bounds = array<i64: 1, 128>}, {transform_indices = @transform_7, window_bounds = array<i64: 1, 128, 128>}, {transform_indices = @transform_8, window_bounds = array<i64: 1, 128, 128>}, {transform_indices = @transform_9, window_bounds = array<i64: 1, 128, 128>}]} {
    %c0 = arith.constant 0 : index
    %c0_0 = arith.constant 0 : index
    %c0_1 = arith.constant 0 : index
    %0 = vector.load %arg2[%c0, %c0_0, %c0_1] : memref<1x128x128xf32, #tpu.memory_space<vmem>>, vector<1x128x128xf32>
    %1 = vector.shape_cast %0 : vector<1x128x128xf32> to vector<128x128xf32>
    %c0_2 = arith.constant 0 : index
    %c0_3 = arith.constant 0 : index
    %2 = vector.load %arg3[%c0_2, %c0_3] : memref<128x128xf32, #tpu.memory_space<vmem>>, vector<128x128xf32>
    %cst = arith.constant dense<0.000000e+00> : vector<128x128xf32>
    %3 = tpu.matmul %1, %2, %cst {dimension_numbers = #tpu.dot_dimension_numbers<[1], [0], [0], [1], [0, 0, 1, 1], [], []>} : vector<128x128xf32>, vector<128x128xf32>, vector<128x128xf32> -> vector<128x128xf32>
    %c0_4 = arith.constant 0 : index
    %c0_5 = arith.constant 0 : index
    %4 = vector.load %arg4[%c0_4, %c0_5] : memref<1x128xf32, #tpu.memory_space<vmem>>, vector<1x128xf32>
    %5 = vector.broadcast %4 : vector<1x128xf32> to vector<128x128xf32>
    %6 = arith.addf %3, %5 : vector<128x128xf32>
    %c0_6 = arith.constant 0 : index
    %c0_7 = arith.constant 0 : index
    %7 = vector.load %arg5[%c0_6, %c0_7] : memref<128x128xf32, #tpu.memory_space<vmem>>, vector<128x128xf32>
    %cst_8 = arith.constant dense<0.000000e+00> : vector<128x128xf32>
    %8 = tpu.matmul %1, %7, %cst_8 {dimension_numbers = #tpu.dot_dimension_numbers<[1], [0], [0], [1], [0, 0, 1, 1], [], []>} : vector<128x128xf32>, vector<128x128xf32>, vector<128x128xf32> -> vector<128x128xf32>
    %c0_9 = arith.constant 0 : index
    %c0_10 = arith.constant 0 : index
    %9 = vector.load %arg6[%c0_9, %c0_10] : memref<1x128xf32, #tpu.memory_space<vmem>>, vector<1x128xf32>
    %10 = vector.broadcast %9 : vector<1x128xf32> to vector<128x128xf32>
    %11 = arith.addf %8, %10 : vector<128x128xf32>
    %c0_11 = arith.constant 0 : index
    %c0_12 = arith.constant 0 : index
    %12 = vector.load %arg7[%c0_11, %c0_12] : memref<128x128xf32, #tpu.memory_space<vmem>>, vector<128x128xf32>
    %cst_13 = arith.constant dense<0.000000e+00> : vector<128x128xf32>
    %13 = tpu.matmul %1, %12, %cst_13 {dimension_numbers = #tpu.dot_dimension_numbers<[1], [0], [0], [1], [0, 0, 1, 1], [], []>} : vector<128x128xf32>, vector<128x128xf32>, vector<128x128xf32> -> vector<128x128xf32>
    %c0_14 = arith.constant 0 : index
    %c0_15 = arith.constant 0 : index
    %14 = vector.load %arg8[%c0_14, %c0_15] : memref<1x128xf32, #tpu.memory_space<vmem>>, vector<1x128xf32>
    %15 = vector.broadcast %14 : vector<1x128xf32> to vector<128x128xf32>
    %16 = arith.addf %13, %15 : vector<128x128xf32>
    %c0_16 = arith.constant 0 : index
    %c0_17 = arith.constant 0 : index
    %c0_18 = arith.constant 0 : index
    %17 = vector.load %arg9[%c0_16, %c0_17, %c0_18] : memref<1x128x128xf32, #tpu.memory_space<vmem>>, vector<1x128x128xf32>
    %18 = vector.shape_cast %17 : vector<1x128x128xf32> to vector<128x128xf32>
    %19 = vector.shape_cast %6 : vector<128x128xf32> to vector<1x128x128xf32>
    tpu.vector_store %arg9[%c0_16, %c0_17, %c0_18], %19 {strides = array<i32>} : memref<1x128x128xf32, #tpu.memory_space<vmem>>, vector<1x128x128xf32>,
    %c0_19 = arith.constant 0 : index
    %c0_20 = arith.constant 0 : index
    %c0_21 = arith.constant 0 : index
    %20 = vector.load %arg10[%c0_19, %c0_20, %c0_21] : memref<1x128x128xf32, #tpu.memory_space<vmem>>, vector<1x128x128xf32>
    %21 = vector.shape_cast %20 : vector<1x128x128xf32> to vector<128x128xf32>
    %22 = vector.shape_cast %11 : vector<128x128xf32> to vector<1x128x128xf32>
    tpu.vector_store %arg10[%c0_19, %c0_20, %c0_21], %22 {strides = array<i32>} : memref<1x128x128xf32, #tpu.memory_space<vmem>>, vector<1x128x128xf32>,
    %c0_22 = arith.constant 0 : index
    %c0_23 = arith.constant 0 : index
    %c0_24 = arith.constant 0 : index
    %23 = vector.load %arg11[%c0_22, %c0_23, %c0_24] : memref<1x128x128xf32, #tpu.memory_space<vmem>>, vector<1x128x128xf32>
    %24 = vector.shape_cast %23 : vector<1x128x128xf32> to vector<128x128xf32>
    %25 = vector.shape_cast %16 : vector<128x128xf32> to vector<1x128x128xf32>
    tpu.vector_store %arg11[%c0_22, %c0_23, %c0_24], %25 {strides = array<i32>} : memref<1x128x128xf32, #tpu.memory_space<vmem>>, vector<1x128x128xf32>,
    return
  }
  func.func @transform_0(%arg0: i32, %arg1: i32) -> (i32, i32, i32) {
    %c0_i32 = arith.constant 0 : i32
    %c0_i32_0 = arith.constant 0 : i32
    return %arg0, %arg1, %c0_i32 : i32, i32, i32
  }
  func.func @transform_1(%arg0: i32, %arg1: i32) -> (i32, i32) {
    %c0_i32 = arith.constant 0 : i32
    %c0_i32_0 = arith.constant 0 : i32
    %c0_i32_1 = arith.constant 0 : i32
    return %c0_i32, %c0_i32_0 : i32, i32
  }
  func.func @transform_2(%arg0: i32, %arg1: i32) -> (i32, i32) {
    %c0_i32 = arith.constant 0 : i32
    %c0_i32_0 = arith.constant 0 : i32
    %c0_i32_1 = arith.constant 0 : i32
    return %c0_i32, %c0_i32_0 : i32, i32
  }
  func.func @transform_3(%arg0: i32, %arg1: i32) -> (i32, i32) {
    %c0_i32 = arith.constant 0 : i32
    %c0_i32_0 = arith.constant 0 : i32
    %c0_i32_1 = arith.constant 0 : i32
    return %c0_i32, %c0_i32_0 : i32, i32
  }
  func.func @transform_4(%arg0: i32, %arg1: i32) -> (i32, i32) {
    %c0_i32 = arith.constant 0 : i32
    %c0_i32_0 = arith.constant 0 : i32
    %c0_i32_1 = arith.constant 0 : i32
    return %c0_i32, %c0_i32_0 : i32, i32
  }
  func.func @transform_5(%arg0: i32, %arg1: i32) -> (i32, i32) {
    %c0_i32 = arith.constant 0 : i32
    %c0_i32_0 = arith.constant 0 : i32
    %c0_i32_1 = arith.constant 0 : i32
    return %c0_i32, %c0_i32_0 : i32, i32
  }
  func.func @transform_6(%arg0: i32, %arg1: i32) -> (i32, i32) {
    %c0_i32 = arith.constant 0 : i32
    %c0_i32_0 = arith.constant 0 : i32
    %c0_i32_1 = arith.constant 0 : i32
    return %c0_i32, %c0_i32_0 : i32, i32
  }
  func.func @transform_7(%arg0: i32, %arg1: i32) -> (i32, i32, i32) {
    %c0_i32 = arith.constant 0 : i32
    %c0_i32_0 = arith.constant 0 : i32
    return %arg0, %arg1, %c0_i32 : i32, i32, i32
  }
  func.func @transform_8(%arg0: i32, %arg1: i32) -> (i32, i32, i32) {
    %c0_i32 = arith.constant 0 : i32
    %c0_i32_0 = arith.constant 0 : i32
    return %arg0, %arg1, %c0_i32 : i32, i32, i32
  }
  func.func @transform_9(%arg0: i32, %arg1: i32) -> (i32, i32, i32) {
    %c0_i32 = arith.constant 0 : i32
    %c0_i32_0 = arith.constant 0 : i32
    return %arg0, %arg1, %c0_i32 : i32, i32, i32
  }
}

</mosaic_0001>

<llo_original>
// kernel: tpu_custom_call.1
$region0: #{tpu_custom_call.1}
  #allocation0 [shape = 'u32[]', space=smem, size = 0x4, offset = 0x4, fixed_abs, tag = 'smem constant byte address 0x4 - core index']
  #allocation1 [shape = 'u32[144,128]{1,0:T(1,128)}', space=vmem, size = 0x12000, scoped, tag = 'internal scratch']
  %s0 = inlined_call_operand.hbm [shape: f32[2,256,128], index: 0, kind: input, shape index: {}]
  %s1 = inlined_call_operand.hbm [shape: f32[128,128], index: 1, kind: input, shape index: {}]
  %s2 = inlined_call_operand.vmem [shape: f32[1,128], index: 2, kind: input, shape index: {}]
  %s3 = inlined_call_operand.hbm [shape: f32[128,128], index: 3, kind: input, shape index: {}]
  %s4 = inlined_call_operand.vmem [shape: f32[1,128], index: 4, kind: input, shape index: {}]
  %s5 = inlined_call_operand.hbm [shape: f32[128,128], index: 5, kind: input, shape index: {}]
  %s6 = inlined_call_operand.vmem [shape: f32[1,128], index: 6, kind: input, shape index: {}]
  %s7 = inlined_call_operand.hbm [shape: f32[2,256,128], index: 7, kind: output, shape index: {0}]
  %s8 = inlined_call_operand.hbm [shape: f32[2,256,128], index: 8, kind: output, shape index: {1}]
  %s9 = inlined_call_operand.hbm [shape: f32[2,256,128], index: 9, kind: output, shape index: {2}]
  %10 = xla_tuple %s7, %s8, %s9
  %s11 = sld [smem:[#allocation0]]
  $region93: #{tpu_custom_call.1} parent=0
    _
  %s13 = ssub.s32 1, %s11
  %s14 = scalar_select 0, %s13, %s11
  $region1: #{tpu_custom_call.1} parent=0
    #allocation2 [shape = 'u8[131072]{0}', space=vmem, size = 0x20000, scoped, tag = 'input window, operand 0']
    #allocation3 [shape = 's32[2]{0}', space=sflag, size = 0x8, scoped, tag = 'scoped memory for tpu_custom_call.1']
    #allocation4 [shape = 's32[2]{0}', space=sflag, size = 0x8, scoped, tag = 'scoped memory for tpu_custom_call.1']
    #allocation5 [shape = 'u8[65536]{0}', space=vmem, size = 0x10000, scoped, tag = 'input window, operand 1, single buffered']
    #allocation6 [shape = 's32[1]{0}', space=sflag, size = 0x4, scoped, tag = 'scoped memory for tpu_custom_call.1']
    #allocation7 [shape = 'u8[65536]{0}', space=vmem, size = 0x10000, scoped, tag = 'input window, operand 3, single buffered']
    #allocation8 [shape = 'u8[65536]{0}', space=vmem, size = 0x10000, scoped, tag = 'input window, operand 5, single buffered']
    #allocation9 [shape = 's32[1]{0}', space=sflag, size = 0x4, scoped, tag = 'scoped memory for tpu_custom_call.1']
    #allocation10 [shape = 'u8[131072]{0}', space=vmem, size = 0x20000, scoped, tag = 'output window, operand 0']
    #allocation11 [shape = 'u8[131072]{0}', space=vmem, size = 0x20000, scoped, tag = 'output window, operand 1']
    #allocation12 [shape = 's32[2]{0}', space=sflag, size = 0x8, scoped, tag = 'scoped memory for tpu_custom_call.1']
    #allocation13 [shape = 'u8[131072]{0}', space=vmem, size = 0x20000, scoped, tag = 'output window, operand 2']
    %15 = vsyncpa [#allocation3], 0
    %s16 = scalar_lea.sflag [#allocation3], 1
    %17 = vsyncpa %s16, 0
    %18 = vsyncpa [#allocation6], 0
    %19 = vsyncpa [#allocation9], 0
    %20 = vsyncpa [#allocation4], 0
    %s21 = scalar_lea.sflag [#allocation4], 1
    %22 = vsyncpa %s21, 0
    %23 = vsyncpa [#allocation12], 0
    %s24 = scalar_lea.sflag [#allocation12], 1
    %25 = vsyncpa %s24, 0
    loop: start=0, step=1, limit=6
    $region2: #{tpu_custom_call.1} parent=1 // loop_pre_header
      _
    $region3: #{tpu_custom_call.1} parent=1 // loop_header
      %s27 = sphi 0, %s31
      %p28 = scmp.ge.s32.totalorder %s27, 6
      %s34 = sphi 0, %s46
      %s35 = sphi 0, %s42
      %s36 = sphi 0, %s34
      %s37 = sphi 0, %s35
      %s38 = sphi 0, %s36
      %s39 = sphi 0, %s37
      %s51 = sphi 0, %s53
      %s54 = sphi 0, %s51
      %s55 = sphi 0, %s54
      %s71 = sphi 0, %s55
      %s75 = sphi 0, %s75
      %s77 = sphi 0, %s75
      %s78 = sphi 0, %s77
      %s92 = sphi 0, %s78
      %s96 = sphi 0, %s96
      %s98 = sphi 0, %s96
      %s99 = sphi 0, %s98
      %s113 = sphi 0, %s99
      %s117 = sphi 0, %s117
      %s119 = sphi 0, %s117
      %s120 = sphi 0, %s119
      %s134 = sphi 0, %s120
      %s138 = sphi 0, %s138
      %s140 = sphi 0, %s138
      %s141 = sphi 0, %s140
      %s155 = sphi 0, %s141
      %s159 = sphi 0, %s159
      %s161 = sphi 0, %s159
      %s162 = sphi 0, %s161
      %s176 = sphi 0, %s162
      %s180 = sphi 0, %s180
      %s182 = sphi 0, %s180
      %s183 = sphi 0, %s182
      %s197 = sphi 0, %s183
      %s205 = sphi 0, %s207
      %s208 = sphi 0, %s205
      %s209 = sphi 0, %s208
      %s225 = sphi 0, %s209
      %s233 = sphi 0, %s235
      %s236 = sphi 0, %s233
      %s237 = sphi 0, %s236
      %s253 = sphi 0, %s237
      %s261 = sphi 0, %s263
      %s264 = sphi 0, %s261
      %s265 = sphi 0, %s264
      %s281 = sphi 0, %s265
    $region4: #{tpu_custom_call.1} parent=1 // loop_header_branch
      %30 = sbr.rel (%p28) target = $region8
    $region5: #{tpu_custom_call.1} parent=1 // loop_body
      %s32 = ssub.s32 %s27, 1
      %s33 = ssub.s32 %s27, 2
      %s40 = sadd.s32 1, %s35
      %p41 = scmp.ge.s32.totalorder %s40, 2
      %s42 = scalar_select %p41, 0, %s40
      %s43 = sadd.s32 1, %s34
      %s44 = scalar_select %p41, %s43, %s34
      %p45 = scmp.ge.s32.totalorder %s44, 2
      %s46 = scalar_select %p45, 0, %s44
      %s47 = ssub.s32 %s34, %s46
      %s48 = ssub.s32 %s35, %s42
      %s49 = sor.u32 %s47, %s48
      %p50 = scmp.eq.s32.totalorder %s49, 0
      %s52 = sadd.s32 %s51, 1
      %s53 = scalar_select %p50, %s51, %s52
      %p56 = pneg %p50
      %p57 = scmp.eq.s32.totalorder %s27, 3
      %p58 = por %p56, %p57
      %p59 = scmp.ne.s32.totalorder %s51, %s54
      %p60 = scmp.eq.s32.totalorder %s27, 0
      %p61 = por %p59, %p60
      %p62 = scmp.ne.s32.totalorder %s51, %s54
      %p63 = scmp.eq.s32.totalorder %s32, 3
      %p64 = por %p62, %p63
      %p65 = scmp.ne.s32.totalorder %s54, %s55
      %p66 = scmp.eq.s32.totalorder %s32, 0
      %p67 = por %p65, %p66
      %p68 = scmp.ne.s32.totalorder %s54, %s55
      %p69 = scmp.eq.s32.totalorder %s33, 3
      %p70 = por %p68, %p69
      %p72 = scmp.ne.s32.totalorder %s55, %s71
      %p73 = scmp.eq.s32.totalorder %s33, 0
      %p74 = por %p72, %p73
      %s76 = sadd.s32 %s75, 1
      %p79 = scmp.eq.s32.totalorder %s27, 3
      %p80 = scmp.ne.s32.totalorder %s75, %s77
      %p81 = scmp.eq.s32.totalorder %s27, 0
      %p82 = por %p80, %p81
      %p83 = scmp.ne.s32.totalorder %s75, %s77
      %p84 = scmp.eq.s32.totalorder %s32, 3
      %p85 = por %p83, %p84
      %p86 = scmp.ne.s32.totalorder %s77, %s78
      %p87 = scmp.eq.s32.totalorder %s32, 0
      %p88 = por %p86, %p87
      %p89 = scmp.ne.s32.totalorder %s77, %s78
      %p90 = scmp.eq.s32.totalorder %s33, 3
      %p91 = por %p89, %p90
      %p93 = scmp.ne.s32.totalorder %s78, %s92
      %p94 = scmp.eq.s32.totalorder %s33, 0
      %p95 = por %p93, %p94
      %s97 = sadd.s32 %s96, 1
      %p100 = scmp.eq.s32.totalorder %s27, 3
      %p101 = scmp.ne.s32.totalorder %s96, %s98
      %p102 = scmp.eq.s32.totalorder %s27, 0
      %p103 = por %p101, %p102
      %p104 = scmp.ne.s32.totalorder %s96, %s98
      %p105 = scmp.eq.s32.totalorder %s32, 3
      %p106 = por %p104, %p105
      %p107 = scmp.ne.s32.totalorder %s98, %s99
      %p108 = scmp.eq.s32.totalorder %s32, 0
      %p109 = por %p107, %p108
      %p110 = scmp.ne.s32.totalorder %s98, %s99
      %p111 = scmp.eq.s32.totalorder %s33, 3
      %p112 = por %p110, %p111
      %p114 = scmp.ne.s32.totalorder %s99, %s113
      %p115 = scmp.eq.s32.totalorder %s33, 0
      %p116 = por %p114, %p115
      %s118 = sadd.s32 %s117, 1
      %p121 = scmp.eq.s32.totalorder %s27, 3
      %p122 = scmp.ne.s32.totalorder %s117, %s119
      %p123 = scmp.eq.s32.totalorder %s27, 0
      %p124 = por %p122, %p123
      %p125 = scmp.ne.s32.totalorder %s117, %s119
      %p126 = scmp.eq.s32.totalorder %s32, 3
      %p127 = por %p125, %p126
      %p128 = scmp.ne.s32.totalorder %s119, %s120
      %p129 = scmp.eq.s32.totalorder %s32, 0
      %p130 = por %p128, %p129
      %p131 = scmp.ne.s32.totalorder %s119, %s120
      %p132 = scmp.eq.s32.totalorder %s33, 3
      %p133 = por %p131, %p132
      %p135 = scmp.ne.s32.totalorder %s120, %s134
      %p136 = scmp.eq.s32.totalorder %s33, 0
      %p137 = por %p135, %p136
      %s139 = sadd.s32 %s138, 1
      %p142 = scmp.eq.s32.totalorder %s27, 3
      %p143 = scmp.ne.s32.totalorder %s138, %s140
      %p144 = scmp.eq.s32.totalorder %s27, 0
      %p145 = por %p143, %p144
      %p146 = scmp.ne.s32.totalorder %s138, %s140
      %p147 = scmp.eq.s32.totalorder %s32, 3
      %p148 = por %p146, %p147
      %p149 = scmp.ne.s32.totalorder %s140, %s141
      %p150 = scmp.eq.s32.totalorder %s32, 0
      %p151 = por %p149, %p150
      %p152 = scmp.ne.s32.totalorder %s140, %s141
      %p153 = scmp.eq.s32.totalorder %s33, 3
      %p154 = por %p152, %p153
      %p156 = scmp.ne.s32.totalorder %s141, %s155
      %p157 = scmp.eq.s32.totalorder %s33, 0
      %p158 = por %p156, %p157
      %s160 = sadd.s32 %s159, 1
      %p163 = scmp.eq.s32.totalorder %s27, 3
      %p164 = scmp.ne.s32.totalorder %s159, %s161
      %p165 = scmp.eq.s32.totalorder %s27, 0
      %p166 = por %p164, %p165
      %p167 = scmp.ne.s32.totalorder %s159, %s161
      %p168 = scmp.eq.s32.totalorder %s32, 3
      %p169 = por %p167, %p168
      %p170 = scmp.ne.s32.totalorder %s161, %s162
      %p171 = scmp.eq.s32.totalorder %s32, 0
      %p172 = por %p170, %p171
      %p173 = scmp.ne.s32.totalorder %s161, %s162
      %p174 = scmp.eq.s32.totalorder %s33, 3
      %p175 = por %p173, %p174
      %p177 = scmp.ne.s32.totalorder %s162, %s176
      %p178 = scmp.eq.s32.totalorder %s33, 0
      %p179 = por %p177, %p178
      %s181 = sadd.s32 %s180, 1
      %p184 = scmp.eq.s32.totalorder %s27, 3
      %p185 = scmp.ne.s32.totalorder %s180, %s182
      %p186 = scmp.eq.s32.totalorder %s27, 0
      %p187 = por %p185, %p186
      %p188 = scmp.ne.s32.totalorder %s180, %s182
      %p189 = scmp.eq.s32.totalorder %s32, 3
      %p190 = por %p188, %p189
      %p191 = scmp.ne.s32.totalorder %s182, %s183
      %p192 = scmp.eq.s32.totalorder %s32, 0
      %p193 = por %p191, %p192
      %p194 = scmp.ne.s32.totalorder %s182, %s183
      %p195 = scmp.eq.s32.totalorder %s33, 3
      %p196 = por %p194, %p195
      %p198 = scmp.ne.s32.totalorder %s183, %s197
      %p199 = scmp.eq.s32.totalorder %s33, 0
      %p200 = por %p198, %p199
      %s201 = ssub.s32 %s34, %s46
      %s202 = ssub.s32 %s35, %s42
      %s203 = sor.u32 %s201, %s202
      %p204 = scmp.eq.s32.totalorder %s203, 0
      %s206 = sadd.s32 %s205, 1
      %s207 = scalar_select %p204, %s205, %s206
      %p210 = pneg %p204
      %p211 = scmp.eq.s32.totalorder %s27, 3
      %p212 = por %p210, %p211
      %p213 = scmp.ne.s32.totalorder %s205, %s208
      %p214 = scmp.eq.s32.totalorder %s27, 0
      %p215 = por %p213, %p214
      %p216 = scmp.ne.s32.totalorder %s205, %s208
      %p217 = scmp.eq.s32.totalorder %s32, 3
      %p218 = por %p216, %p217
      %p219 = scmp.ne.s32.totalorder %s208, %s209
      %p220 = scmp.eq.s32.totalorder %s32, 0
      %p221 = por %p219, %p220
      %p222 = scmp.ne.s32.totalorder %s208, %s209
      %p223 = scmp.eq.s32.totalorder %s33, 3
      %p224 = por %p222, %p223
      %p226 = scmp.ne.s32.totalorder %s209, %s225
      %p227 = scmp.eq.s32.totalorder %s33, 0
      %p228 = por %p226, %p227
      %s229 = ssub.s32 %s34, %s46
      %s230 = ssub.s32 %s35, %s42
      %s231 = sor.u32 %s229, %s230
      %p232 = scmp.eq.s32.totalorder %s231, 0
      %s234 = sadd.s32 %s233, 1
      %s235 = scalar_select %p232, %s233, %s234
      %p238 = pneg %p232
      %p239 = scmp.eq.s32.totalorder %s27, 3
      %p240 = por %p238, %p239
      %p241 = scmp.ne.s32.totalorder %s233, %s236
      %p242 = scmp.eq.s32.totalorder %s27, 0
      %p243 = por %p241, %p242
      %p244 = scmp.ne.s32.totalorder %s233, %s236
      %p245 = scmp.eq.s32.totalorder %s32, 3
      %p246 = por %p244, %p245
      %p247 = scmp.ne.s32.totalorder %s236, %s237
      %p248 = scmp.eq.s32.totalorder %s32, 0
      %p249 = por %p247, %p248
      %p250 = scmp.ne.s32.totalorder %s236, %s237
      %p251 = scmp.eq.s32.totalorder %s33, 3
      %p252 = por %p250, %p251
      %p254 = scmp.ne.s32.totalorder %s237, %s253
      %p255 = scmp.eq.s32.totalorder %s33, 0
      %p256 = por %p254, %p255
      %s257 = ssub.s32 %s34, %s46
      %s258 = ssub.s32 %s35, %s42
      %s259 = sor.u32 %s257, %s258
      %p260 = scmp.eq.s32.totalorder %s259, 0
      %s262 = sadd.s32 %s261, 1
      %s263 = scalar_select %p260, %s261, %s262
      %p266 = pneg %p260
      %p267 = scmp.eq.s32.totalorder %s27, 3
      %p268 = por %p266, %p267
      %p269 = scmp.ne.s32.totalorder %s261, %s264
      %p270 = scmp.eq.s32.totalorder %s27, 0
      %p271 = por %p269, %p270
      %p272 = scmp.ne.s32.totalorder %s261, %s264
      %p273 = scmp.eq.s32.totalorder %s32, 3
      %p274 = por %p272, %p273
      %p275 = scmp.ne.s32.totalorder %s264, %s265
      %p276 = scmp.eq.s32.totalorder %s32, 0
      %p277 = por %p275, %p276
      %p278 = scmp.ne.s32.totalorder %s264, %s265
      %p279 = scmp.eq.s32.totalorder %s33, 3
      %p280 = por %p278, %p279
      %p282 = scmp.ne.s32.totalorder %s265, %s281
      %p283 = scmp.eq.s32.totalorder %s33, 0
      %p284 = por %p282, %p283
      %p285 = scmp.le.s32.totalorder 1, %s27
      %p286 = scmp.lt.s32.totalorder %s27, 5
      %p287 = pnand %p285, %p286
      %p288 = pneg %p287
      // Predicated region
      $region9: #{tpu_custom_call.1} parent=5 // pred_check
        _
      $region10: #{tpu_custom_call.1} parent=5 // pred_check_branch
        %290 = sbr.rel (%p287) target = $region12
      $region11: #{tpu_custom_call.1} parent=5 // pred_region
        %s291 = ssub.s32 %s27, 1
        // Predicated region
        $region13: #{tpu_custom_call.1} parent=11 // pred_check
          %p292 = pneg %p88
        $region14: #{tpu_custom_call.1} parent=11 // pred_check_branch
          %294 = sbr.rel (%p292) target = $region16
        $region15: #{tpu_custom_call.1} parent=11 // pred_region
          %s296 = ssub.s32 2048, 2048
          %297 = vsyncadd [#allocation6], %s296
          %s298 = sshll.u32 [#allocation5], 4
          %s299 = int_to_ptr.vmem [resolvable:$true] %s298
          %304 = dma.hbm_to_vmem [thread:$0]  %s1, 2048, %s299, [#allocation6], 128, 128, 8
        $region16: #{tpu_custom_call.1} parent=11 // pred_fallthru
          _
        // Predicated region
        $region17: #{tpu_custom_call.1} parent=11 // pred_check
          %p305 = pneg %p109
        $region18: #{tpu_custom_call.1} parent=11 // pred_check_branch
          %307 = sbr.rel (%p305) target = $region20
        $region19: #{tpu_custom_call.1} parent=11 // pred_region
          _
        $region20: #{tpu_custom_call.1} parent=11 // pred_fallthru
          _
        // Predicated region
        $region21: #{tpu_custom_call.1} parent=11 // pred_check
          %p308 = pneg %p130
        $region22: #{tpu_custom_call.1} parent=11 // pred_check_branch
          %310 = sbr.rel (%p308) target = $region24
        $region23: #{tpu_custom_call.1} parent=11 // pred_region
          %s312 = ssub.s32 2048, 2048
          %313 = vsyncadd [#allocation6], %s312
          %s314 = sshll.u32 [#allocation7], 4
          %s315 = int_to_ptr.vmem [resolvable:$true] %s314
          %320 = dma.hbm_to_vmem [thread:$0]  %s3, 2048, %s315, [#allocation6], 128, 128, 8
        $region24: #{tpu_custom_call.1} parent=11 // pred_fallthru
          _
        // Predicated region
        $region25: #{tpu_custom_call.1} parent=11 // pred_check
          %p321 = pneg %p151
        $region26: #{tpu_custom_call.1} parent=11 // pred_check_branch
          %323 = sbr.rel (%p321) target = $region28
        $region27: #{tpu_custom_call.1} parent=11 // pred_region
          _
        $region28: #{tpu_custom_call.1} parent=11 // pred_fallthru
          _
        // Predicated region
        $region29: #{tpu_custom_call.1} parent=11 // pred_check
          %p324 = pneg %p172
        $region30: #{tpu_custom_call.1} parent=11 // pred_check_branch
          %326 = sbr.rel (%p324) target = $region32
        $region31: #{tpu_custom_call.1} parent=11 // pred_region
          %s328 = ssub.s32 2048, 2048
          %329 = vsyncadd [#allocation9], %s328
          %s330 = sshll.u32 [#allocation8], 4
          %s331 = int_to_ptr.vmem [resolvable:$true] %s330
          %336 = dma.hbm_to_vmem [thread:$0]  %s5, 2048, %s331, [#allocation9], 128, 128, 8
        $region32: #{tpu_custom_call.1} parent=11 // pred_fallthru
          _
        // Predicated region
        $region33: #{tpu_custom_call.1} parent=11 // pred_check
          %p337 = pneg %p193
        $region34: #{tpu_custom_call.1} parent=11 // pred_check_branch
          %339 = sbr.rel (%p337) target = $region36
        $region35: #{tpu_custom_call.1} parent=11 // pred_region
          _
        $region36: #{tpu_custom_call.1} parent=11 // pred_fallthru
          _
      $region12: #{tpu_custom_call.1} parent=5 // pred_fallthru
        _
      %p340 = scmp.lt.s32.totalorder %s27, 4
      // Predicated region
      $region37: #{tpu_custom_call.1} parent=5 // pred_check
        %p341 = pneg %p340
      $region38: #{tpu_custom_call.1} parent=5 // pred_check_branch
        %343 = sbr.rel (%p341) target = $region40
      $region39: #{tpu_custom_call.1} parent=5 // pred_region
        // Predicated region
        $region41: #{tpu_custom_call.1} parent=39 // pred_check
          %p344 = pneg %p61
        $region42: #{tpu_custom_call.1} parent=39 // pred_check_branch
          %346 = sbr.rel (%p344) target = $region44
        $region43: #{tpu_custom_call.1} parent=39 // pred_region
          %s347 = sand.u32 %s51, 1
          %s348 = scalar_lea.sflag [#allocation3], %s347
          %s349 = sand.u32 %s51, 1
          %s350 = smul.addr %s349, 128
          %s351 = scalar_lea.vmem [#allocation2], %s350
          %s352 = smul.u32 16, %s35
          %s354 = ssub.s32 2048, 2048
          %355 = vsyncadd %s348, %s354
          %s356 = smul.addr %s34, 32
          %s357 = sadd.s32 %s352, %s356
          %s358 = smul.addr %s357, 128
          %s359 = scalar_lea.hbm %s0, %s358
          %s360 = sshll.u32 %s351, 4
          %s361 = int_to_ptr.vmem [resolvable:$true] %s360
          %366 = dma.hbm_to_vmem [thread:$0]  %s359, 2048, %s361, %s348, 128, 128, 8
        $region44: #{tpu_custom_call.1} parent=39 // pred_fallthru
          _
      $region40: #{tpu_custom_call.1} parent=5 // pred_fallthru
        _
      %p367 = scmp.le.s32.totalorder 1, %s27
      %p368 = scmp.lt.s32.totalorder %s27, 5
      %p369 = pnand %p367, %p368
      %p370 = pneg %p369
      // Predicated region
      $region45: #{tpu_custom_call.1} parent=5 // pred_check
        _
      $region46: #{tpu_custom_call.1} parent=5 // pred_check_branch
        %372 = sbr.rel (%p369) target = $region48
      $region47: #{tpu_custom_call.1} parent=5 // pred_region
        %s373 = ssub.s32 %s27, 1
        %s374 = sand.u32 %s54, 1
        %s375 = scalar_lea.sflag [#allocation3], %s374
        %s376 = sand.u32 %s54, 1
        %s377 = smul.addr %s376, 128
        %s378 = scalar_lea.vmem [#allocation2], %s377
        // Predicated region
        $region49: #{tpu_custom_call.1} parent=47 // pred_check
          %p379 = pneg %p67
        $region50: #{tpu_custom_call.1} parent=47 // pred_check_branch
          %381 = sbr.rel (%p379) target = $region52
        $region51: #{tpu_custom_call.1} parent=47 // pred_region
          %382 = dma.done %s375, 2048
        $region52: #{tpu_custom_call.1} parent=47 // pred_fallthru
          _
        // Predicated region
        $region53: #{tpu_custom_call.1} parent=47 // pred_check
          %p383 = pneg %p88
        $region54: #{tpu_custom_call.1} parent=47 // pred_check_branch
          %385 = sbr.rel (%p383) target = $region56
        $region55: #{tpu_custom_call.1} parent=47 // pred_region
          %386 = dma.done [#allocation6], 2048
        $region56: #{tpu_custom_call.1} parent=47 // pred_fallthru
          _
        // Predicated region
        $region57: #{tpu_custom_call.1} parent=47 // pred_check
          %p387 = pneg %p130
        $region58: #{tpu_custom_call.1} parent=47 // pred_check_branch
          %389 = sbr.rel (%p387) target = $region60
        $region59: #{tpu_custom_call.1} parent=47 // pred_region
          %390 = dma.done [#allocation6], 2048
        $region60: #{tpu_custom_call.1} parent=47 // pred_fallthru
          _
        // Predicated region
        $region61: #{tpu_custom_call.1} parent=47 // pred_check
          %p391 = pneg %p172
        $region62: #{tpu_custom_call.1} parent=47 // pred_check_branch
          %393 = sbr.rel (%p391) target = $region64
        $region63: #{tpu_custom_call.1} parent=47 // pred_region
          %394 = dma.done [#allocation9], 2048
        $region64: #{tpu_custom_call.1} parent=47 // pred_fallthru
          _
        %s395 = sand.u32 %s54, 1
        %s396 = scalar_lea.sflag [#allocation3], %s395
        %s397 = sand.u32 %s54, 1
        %s398 = smul.addr %s397, 128
        %s399 = scalar_lea.vmem [#allocation2], %s398
        %p400 = pneg %p67
        %p401 = pneg %p64
        %p402 = pneg %p88
        %p403 = pneg %p85
        %p404 = pneg %p109
        %p405 = pneg %p106
        %p406 = pneg %p130
        %p407 = pneg %p127
        %p408 = pneg %p151
        %p409 = pneg %p148
        %p410 = pneg %p172
        %p411 = pneg %p169
        %p412 = pneg %p193
        %p413 = pneg %p190
        %p414 = pneg %p221
        %p415 = pneg %p218
        %s416 = sand.u32 %s208, 1
        %s417 = scalar_lea.sflag [#allocation4], %s416
        %s418 = sand.u32 %s208, 1
        %s419 = smul.addr %s418, 128
        %s420 = scalar_lea.vmem [#allocation10], %s419
        %p421 = pneg %p249
        %p422 = pneg %p246
        %s423 = sand.u32 %s32, 1
        %s424 = scalar_lea.sflag [#allocation12], %s423
        %s425 = sand.u32 %s236, 1
        %s426 = smul.addr %s425, 128
        %s427 = scalar_lea.vmem [#allocation11], %s426
        %p428 = pneg %p277
        %p429 = pneg %p274
        %s430 = sand.u32 %s32, 1
        %s431 = scalar_lea.sflag [#allocation12], %s430
        %s432 = sand.u32 %s264, 1
        %s433 = smul.addr %s432, 128
        %s434 = scalar_lea.vmem [#allocation13], %s433
        %s435 = smul.u32 16, %s37
        %s436 = smul.u32 16, %s37
        %s437 = smul.u32 16, %s37
        %s438 = smul.u32 16, %s37
        %v439 = vld [vmem:[%s378] sm:$0xff]
        %v440 = vld [vmem:[%s378 + $0x8] sm:$0xff]
        %v441 = vld [vmem:[%s378 + $0x10] sm:$0xff]
        %v442 = vld [vmem:[%s378 + $0x18] sm:$0xff]
        %v443 = vld [vmem:[%s378 + $0x20] sm:$0xff]
        %v444 = vld [vmem:[%s378 + $0x28] sm:$0xff]
        %v445 = vld [vmem:[%s378 + $0x30] sm:$0xff]
        %v446 = vld [vmem:[%s378 + $0x38] sm:$0xff]
        %v447 = vld [vmem:[%s378 + $0x40] sm:$0xff]
        %v448 = vld [vmem:[%s378 + $0x48] sm:$0xff]
        %v449 = vld [vmem:[%s378 + $0x50] sm:$0xff]
        %v450 = vld [vmem:[%s378 + $0x58] sm:$0xff]
        %v451 = vld [vmem:[%s378 + $0x60] sm:$0xff]
        %v452 = vld [vmem:[%s378 + $0x68] sm:$0xff]
        %v453 = vld [vmem:[%s378 + $0x70] sm:$0xff]
        %v454 = vld [vmem:[%s378 + $0x78] sm:$0xff]
        %v455 = vld [vmem:[#allocation5] sm:$0xff]
        %v456 = vld [vmem:[#allocation5 + $0x8] sm:$0xff]
        %v457 = vld [vmem:[#allocation5 + $0x10] sm:$0xff]
        %v458 = vld [vmem:[#allocation5 + $0x18] sm:$0xff]
        %v459 = vld [vmem:[#allocation5 + $0x20] sm:$0xff]
        %v460 = vld [vmem:[#allocation5 + $0x28] sm:$0xff]
        %v461 = vld [vmem:[#allocation5 + $0x30] sm:$0xff]
        %v462 = vld [vmem:[#allocation5 + $0x38] sm:$0xff]
        %v463 = vld [vmem:[#allocation5 + $0x40] sm:$0xff]
        %v464 = vld [vmem:[#allocation5 + $0x48] sm:$0xff]
        %v465 = vld [vmem:[#allocation5 + $0x50] sm:$0xff]
        %v466 = vld [vmem:[#allocation5 + $0x58] sm:$0xff]
        %v467 = vld [vmem:[#allocation5 + $0x60] sm:$0xff]
        %v468 = vld [vmem:[#allocation5 + $0x68] sm:$0xff]
        %v469 = vld [vmem:[#allocation5 + $0x70] sm:$0xff]
        %v470 = vld [vmem:[#allocation5 + $0x78] sm:$0xff]
        %v471 = vld [vmem:[%s2] sm:$0x1]
        %v473 = vlaneseq
        %v474 = vshrl.u32 %v473, 7
        %v475 = vsub.s32 0, %v474
        %v476 = vrot.slane %v471, %v475
        %478 = vmatprep.subr.mxu0 0.0
        %479 = vmatpush1.msra.mxu0 %v455
        %480 = vmatprep.subr.mxu0 0.0
        %481 = vmatpush1.msra.mxu0 %v456
        %482 = vmatprep.subr.mxu0 0.0
        %483 = vmatpush1.msra.mxu0 %v457
        %484 = vmatprep.subr.mxu0 0.0
        %485 = vmatpush1.msra.mxu0 %v458
        %486 = vmatprep.subr.mxu0 0.0
        %487 = vmatpush1.msra.mxu0 %v459
        %488 = vmatprep.subr.mxu0 0.0
        %489 = vmatpush1.msra.mxu0 %v460
        %490 = vmatprep.subr.mxu0 0.0
        %491 = vmatpush1.msra.mxu0 %v461
        %492 = vmatprep.subr.mxu0 0.0
        %493 = vmatpush1.msra.mxu0 %v462
        %494 = vmatprep.subr.mxu0 0.0
        %495 = vmatpush1.msra.mxu0 %v463
        %496 = vmatprep.subr.mxu0 0.0
        %497 = vmatpush1.msra.mxu0 %v464
        %498 = vmatprep.subr.mxu0 0.0
        %499 = vmatpush1.msra.mxu0 %v465
        %500 = vmatprep.subr.mxu0 0.0
        %501 = vmatpush1.msra.mxu0 %v466
        %502 = vmatprep.subr.mxu0 0.0
        %503 = vmatpush1.msra.mxu0 %v467
        %504 = vmatprep.subr.mxu0 0.0
        %505 = vmatpush1.msra.mxu0 %v468
        %506 = vmatprep.subr.mxu0 0.0
        %507 = vmatpush1.msra.mxu0 %v469
        %508 = vmatprep.subr.mxu0 0.0
        %509 = vmatpush1.msra.mxu0 %v470
        %510 = vmatprep.subr.mxu0 0.0
        %511 = vmatpush1.msra.mxu0 0.0
        %512 = vmatprep.subr.mxu0 0.0
        %513 = vmatpush1.msra.mxu0 0.0
        %514 = vmatprep.subr.mxu0 0.0
        %515 = vmatpush1.msra.mxu0 0.0
        %516 = vmatprep.subr.mxu0 0.0
        %517 = vmatpush1.msra.mxu0 0.0
        %518 = vmatprep.subr.mxu0 0.0
        %519 = vmatpush1.msra.mxu0 0.0
        %520 = vmatprep.subr.mxu0 0.0
        %521 = vmatpush1.msra.mxu0 0.0
        %522 = vmatprep.subr.mxu0 0.0
        %523 = vmatpush1.msra.mxu0 0.0
        %524 = vmatprep.subr.mxu0 0.0
        %525 = vmatpush1.msra.mxu0 0.0
        %526 = vmatprep.subr.mxu0 0.0
        %527 = vmatpush1.msra.mxu0 0.0
        %528 = vmatprep.subr.mxu0 0.0
        %529 = vmatpush1.msra.mxu0 0.0
        %530 = vmatprep.subr.mxu0 0.0
        %531 = vmatpush1.msra.mxu0 0.0
        %532 = vmatprep.subr.mxu0 0.0
        %533 = vmatpush1.msra.mxu0 0.0
        %534 = vmatprep.subr.mxu0 0.0
        %535 = vmatpush1.msra.mxu0 0.0
        %536 = vmatprep.subr.mxu0 0.0
        %537 = vmatpush1.msra.mxu0 0.0
        %538 = vmatprep.subr.mxu0 0.0
        %539 = vmatpush1.msra.mxu0 0.0
        %540 = vmatprep.subr.mxu0 0.0
        %541 = vmatpush1.msra.mxu0 0.0
        %542 = vmatprep.mubr.f32.mxu0 0.0
        %543 = vmatmul.mubr.f32.gmra.mrb[0].mxu0 %v439
        %v544 = vpop.f32.mrb[0].mxu0
        %v545 = vadd.f32 %v476, %v544
        %v546 = vpop.f32.mrb[0].mxu0
        %547 = vmatprep.mubr.f32.mxu0 0.0
        %548 = vmatmul.mubr.f32.gmra.mrb[0].mxu0 %v440
        %v549 = vpop.f32.mrb[0].mxu0
        %v550 = vadd.f32 %v476, %v549
        %v551 = vpop.f32.mrb[0].mxu0
        %552 = vmatprep.mubr.f32.mxu0 0.0
        %553 = vmatmul.mubr.f32.gmra.mrb[0].mxu0 %v441
        %v554 = vpop.f32.mrb[0].mxu0
        %v555 = vadd.f32 %v476, %v554
        %v556 = vpop.f32.mrb[0].mxu0
        %557 = vmatprep.mubr.f32.mxu0 0.0
        %558 = vmatmul.mubr.f32.gmra.mrb[0].mxu0 %v442
        %v559 = vpop.f32.mrb[0].mxu0
        %v560 = vadd.f32 %v476, %v559
        %v561 = vpop.f32.mrb[0].mxu0
        %562 = vmatprep.mubr.f32.mxu0 0.0
        %563 = vmatmul.mubr.f32.gmra.mrb[0].mxu0 %v443
        %v564 = vpop.f32.mrb[0].mxu0
        %v565 = vadd.f32 %v476, %v564
        %v566 = vpop.f32.mrb[0].mxu0
        %567 = vmatprep.mubr.f32.mxu0 0.0
        %568 = vmatmul.mubr.f32.gmra.mrb[0].mxu0 %v444
        %v569 = vpop.f32.mrb[0].mxu0
        %v570 = vadd.f32 %v476, %v569
        %v571 = vpop.f32.mrb[0].mxu0
        %572 = vmatprep.mubr.f32.mxu0 0.0
        %573 = vmatmul.mubr.f32.gmra.mrb[0].mxu0 %v445
        %v574 = vpop.f32.mrb[0].mxu0
        %v575 = vadd.f32 %v476, %v574
        %v576 = vpop.f32.mrb[0].mxu0
        %577 = vmatprep.mubr.f32.mxu0 0.0
        %578 = vmatmul.mubr.f32.gmra.mrb[0].mxu0 %v446
        %v579 = vpop.f32.mrb[0].mxu0
        %v580 = vadd.f32 %v476, %v579
        %v581 = vpop.f32.mrb[0].mxu0
        %582 = vmatprep.mubr.f32.mxu0 0.0
        %583 = vmatmul.mubr.f32.gmra.mrb[0].mxu0 %v447
        %v584 = vpop.f32.mrb[0].mxu0
        %v585 = vadd.f32 %v476, %v584
        %v586 = vpop.f32.mrb[0].mxu0
        %587 = vmatprep.mubr.f32.mxu0 0.0
        %588 = vmatmul.mubr.f32.gmra.mrb[0].mxu0 %v448
        %v589 = vpop.f32.mrb[0].mxu0
        %v590 = vadd.f32 %v476, %v589
        %v591 = vpop.f32.mrb[0].mxu0
        %592 = vmatprep.mubr.f32.mxu0 0.0
        %593 = vmatmul.mubr.f32.gmra.mrb[0].mxu0 %v449
        %v594 = vpop.f32.mrb[0].mxu0
        %v595 = vadd.f32 %v476, %v594
        %v596 = vpop.f32.mrb[0].mxu0
        %597 = vmatprep.mubr.f32.mxu0 0.0
        %598 = vmatmul.mubr.f32.gmra.mrb[0].mxu0 %v450
        %v599 = vpop.f32.mrb[0].mxu0
        %v600 = vadd.f32 %v476, %v599
        %v601 = vpop.f32.mrb[0].mxu0
        %602 = vmatprep.mubr.f32.mxu0 0.0
        %603 = vmatmul.mubr.f32.gmra.mrb[0].mxu0 %v451
        %v604 = vpop.f32.mrb[0].mxu0
        %v605 = vadd.f32 %v476, %v604
        %v606 = vpop.f32.mrb[0].mxu0
        %607 = vmatprep.mubr.f32.mxu0 0.0
        %608 = vmatmul.mubr.f32.gmra.mrb[0].mxu0 %v452
        %v609 = vpop.f32.mrb[0].mxu0
        %v610 = vadd.f32 %v476, %v609
        %v611 = vpop.f32.mrb[0].mxu0
        %612 = vmatprep.mubr.f32.mxu0 0.0
        %613 = vmatmul.mubr.f32.gmra.mrb[0].mxu0 %v453
        %v614 = vpop.f32.mrb[0].mxu0
        %v615 = vadd.f32 %v476, %v614
        %v616 = vpop.f32.mrb[0].mxu0
        %617 = vmatprep.mubr.f32.mxu0 0.0
        %618 = vmatmul.mubr.f32.gmra.mrb[0].mxu0 %v454
        %v619 = vpop.f32.mrb[0].mxu0
        %v620 = vadd.f32 %v476, %v619
        %v621 = vpop.f32.mrb[0].mxu0
        %622 = vdwg.mxu0
        %v623 = vld [vmem:[#allocation7] sm:$0xff]
        %v624 = vld [vmem:[#allocation7 + $0x8] sm:$0xff]
        %v625 = vld [vmem:[#allocation7 + $0x10] sm:$0xff]
        %v626 = vld [vmem:[#allocation7 + $0x18] sm:$0xff]
        %v627 = vld [vmem:[#allocation7 + $0x20] sm:$0xff]
        %v628 = vld [vmem:[#allocation7 + $0x28] sm:$0xff]
        %v629 = vld [vmem:[#allocation7 + $0x30] sm:$0xff]
        %v630 = vld [vmem:[#allocation7 + $0x38] sm:$0xff]
        %v631 = vld [vmem:[#allocation7 + $0x40] sm:$0xff]
        %v632 = vld [vmem:[#allocation7 + $0x48] sm:$0xff]
        %v633 = vld [vmem:[#allocation7 + $0x50] sm:$0xff]
        %v634 = vld [vmem:[#allocation7 + $0x58] sm:$0xff]
        %v635 = vld [vmem:[#allocation7 + $0x60] sm:$0xff]
        %v636 = vld [vmem:[#allocation7 + $0x68] sm:$0xff]
        %v637 = vld [vmem:[#allocation7 + $0x70] sm:$0xff]
        %v638 = vld [vmem:[#allocation7 + $0x78] sm:$0xff]
        %v639 = vld [vmem:[%s4] sm:$0x1]
        %v641 = vlaneseq
        %v642 = vshrl.u32 %v641, 7
        %v643 = vsub.s32 0, %v642
        %v644 = vrot.slane %v639, %v643
        %646 = vmatprep.subr.mxu0 0.0
        %647 = vmatpush1.msra.mxu0 %v623
        %648 = vmatprep.subr.mxu0 0.0
        %649 = vmatpush1.msra.mxu0 %v624
        %650 = vmatprep.subr.mxu0 0.0
        %651 = vmatpush1.msra.mxu0 %v625
        %652 = vmatprep.subr.mxu0 0.0
        %653 = vmatpush1.msra.mxu0 %v626
        %654 = vmatprep.subr.mxu0 0.0
        %655 = vmatpush1.msra.mxu0 %v627
        %656 = vmatprep.subr.mxu0 0.0
        %657 = vmatpush1.msra.mxu0 %v628
        %658 = vmatprep.subr.mxu0 0.0
        %659 = vmatpush1.msra.mxu0 %v629
        %660 = vmatprep.subr.mxu0 0.0
        %661 = vmatpush1.msra.mxu0 %v630
        %662 = vmatprep.subr.mxu0 0.0
        %663 = vmatpush1.msra.mxu0 %v631
        %664 = vmatprep.subr.mxu0 0.0
        %665 = vmatpush1.msra.mxu0 %v632
        %666 = vmatprep.subr.mxu0 0.0
        %667 = vmatpush1.msra.mxu0 %v633
        %668 = vmatprep.subr.mxu0 0.0
        %669 = vmatpush1.msra.mxu0 %v634
        %670 = vmatprep.subr.mxu0 0.0
        %671 = vmatpush1.msra.mxu0 %v635
        %672 = vmatprep.subr.mxu0 0.0
        %673 = vmatpush1.msra.mxu0 %v636
        %674 = vmatprep.subr.mxu0 0.0
        %675 = vmatpush1.msra.mxu0 %v637
        %676 = vmatprep.subr.mxu0 0.0
        %677 = vmatpush1.msra.mxu0 %v638
        %678 = vmatprep.subr.mxu0 0.0
        %679 = vmatpush1.msra.mxu0 0.0
        %680 = vmatprep.subr.mxu0 0.0
        %681 = vmatpush1.msra.mxu0 0.0
        %682 = vmatprep.subr.mxu0 0.0
        %683 = vmatpush1.msra.mxu0 0.0
        %684 = vmatprep.subr.mxu0 0.0
        %685 = vmatpush1.msra.mxu0 0.0
        %686 = vmatprep.subr.mxu0 0.0
        %687 = vmatpush1.msra.mxu0 0.0
        %688 = vmatprep.subr.mxu0 0.0
        %689 = vmatpush1.msra.mxu0 0.0
        %690 = vmatprep.subr.mxu0 0.0
        %691 = vmatpush1.msra.mxu0 0.0
        %692 = vmatprep.subr.mxu0 0.0
        %693 = vmatpush1.msra.mxu0 0.0
        %694 = vmatprep.subr.mxu0 0.0
        %695 = vmatpush1.msra.mxu0 0.0
        %696 = vmatprep.subr.mxu0 0.0
        %697 = vmatpush1.msra.mxu0 0.0
        %698 = vmatprep.subr.mxu0 0.0
        %699 = vmatpush1.msra.mxu0 0.0
        %700 = vmatprep.subr.mxu0 0.0
        %701 = vmatpush1.msra.mxu0 0.0
        %702 = vmatprep.subr.mxu0 0.0
        %703 = vmatpush1.msra.mxu0 0.0
        %704 = vmatprep.subr.mxu0 0.0
        %705 = vmatpush1.msra.mxu0 0.0
        %706 = vmatprep.subr.mxu0 0.0
        %707 = vmatpush1.msra.mxu0 0.0
        %708 = vmatprep.subr.mxu0 0.0
        %709 = vmatpush1.msra.mxu0 0.0
        %710 = vmatprep.mubr.f32.mxu0 0.0
        %711 = vmatmul.mubr.f32.gmra.mrb[0].mxu0 %v439
        %v712 = vpop.f32.mrb[0].mxu0
        %v713 = vadd.f32 %v644, %v712
        %v714 = vpop.f32.mrb[0].mxu0
        %715 = vmatprep.mubr.f32.mxu0 0.0
        %716 = vmatmul.mubr.f32.gmra.mrb[0].mxu0 %v440
        %v717 = vpop.f32.mrb[0].mxu0
        %v718 = vadd.f32 %v644, %v717
        %v719 = vpop.f32.mrb[0].mxu0
        %720 = vmatprep.mubr.f32.mxu0 0.0
        %721 = vmatmul.mubr.f32.gmra.mrb[0].mxu0 %v441
        %v722 = vpop.f32.mrb[0].mxu0
        %v723 = vadd.f32 %v644, %v722
        %v724 = vpop.f32.mrb[0].mxu0
        %725 = vmatprep.mubr.f32.mxu0 0.0
        %726 = vmatmul.mubr.f32.gmra.mrb[0].mxu0 %v442
        %v727 = vpop.f32.mrb[0].mxu0
        %v728 = vadd.f32 %v644, %v727
        %v729 = vpop.f32.mrb[0].mxu0
        %730 = vmatprep.mubr.f32.mxu0 0.0
        %731 = vmatmul.mubr.f32.gmra.mrb[0].mxu0 %v443
        %v732 = vpop.f32.mrb[0].mxu0
        %v733 = vadd.f32 %v644, %v732
        %v734 = vpop.f32.mrb[0].mxu0
        %735 = vmatprep.mubr.f32.mxu0 0.0
        %736 = vmatmul.mubr.f32.gmra.mrb[0].mxu0 %v444
        %v737 = vpop.f32.mrb[0].mxu0
        %v738 = vadd.f32 %v644, %v737
        %v739 = vpop.f32.mrb[0].mxu0
        %740 = vmatprep.mubr.f32.mxu0 0.0
        %741 = vmatmul.mubr.f32.gmra.mrb[0].mxu0 %v445
        %v742 = vpop.f32.mrb[0].mxu0
        %v743 = vadd.f32 %v644, %v742
        %v744 = vpop.f32.mrb[0].mxu0
        %745 = vmatprep.mubr.f32.mxu0 0.0
        %746 = vmatmul.mubr.f32.gmra.mrb[0].mxu0 %v446
        %v747 = vpop.f32.mrb[0].mxu0
        %v748 = vadd.f32 %v644, %v747
        %v749 = vpop.f32.mrb[0].mxu0
        %750 = vmatprep.mubr.f32.mxu0 0.0
        %751 = vmatmul.mubr.f32.gmra.mrb[0].mxu0 %v447
        %v752 = vpop.f32.mrb[0].mxu0
        %v753 = vadd.f32 %v644, %v752
        %v754 = vpop.f32.mrb[0].mxu0
        %755 = vmatprep.mubr.f32.mxu0 0.0
        %756 = vmatmul.mubr.f32.gmra.mrb[0].mxu0 %v448
        %v757 = vpop.f32.mrb[0].mxu0
        %v758 = vadd.f32 %v644, %v757
        %v759 = vpop.f32.mrb[0].mxu0
        %760 = vmatprep.mubr.f32.mxu0 0.0
        %761 = vmatmul.mubr.f32.gmra.mrb[0].mxu0 %v449
        %v762 = vpop.f32.mrb[0].mxu0
        %v763 = vadd.f32 %v644, %v762
        %v764 = vpop.f32.mrb[0].mxu0
        %765 = vmatprep.mubr.f32.mxu0 0.0
        %766 = vmatmul.mubr.f32.gmra.mrb[0].mxu0 %v450
        %v767 = vpop.f32.mrb[0].mxu0
        %v768 = vadd.f32 %v644, %v767
        %v769 = vpop.f32.mrb[0].mxu0
        %770 = vmatprep.mubr.f32.mxu0 0.0
        %771 = vmatmul.mubr.f32.gmra.mrb[0].mxu0 %v451
        %v772 = vpop.f32.mrb[0].mxu0
        %v773 = vadd.f32 %v644, %v772
        %v774 = vpop.f32.mrb[0].mxu0
        %775 = vmatprep.mubr.f32.mxu0 0.0
        %776 = vmatmul.mubr.f32.gmra.mrb[0].mxu0 %v452
        %v777 = vpop.f32.mrb[0].mxu0
        %v778 = vadd.f32 %v644, %v777
        %v779 = vpop.f32.mrb[0].mxu0
        %780 = vmatprep.mubr.f32.mxu0 0.0
        %781 = vmatmul.mubr.f32.gmra.mrb[0].mxu0 %v453
        %v782 = vpop.f32.mrb[0].mxu0
        %v783 = vadd.f32 %v644, %v782
        %v784 = vpop.f32.mrb[0].mxu0
        %785 = vmatprep.mubr.f32.mxu0 0.0
        %786 = vmatmul.mubr.f32.gmra.mrb[0].mxu0 %v454
        %v787 = vpop.f32.mrb[0].mxu0
        %v788 = vadd.f32 %v644, %v787
        %v789 = vpop.f32.mrb[0].mxu0
        %790 = vdwg.mxu0
        %v791 = vld [vmem:[#allocation8] sm:$0xff]
        %v792 = vld [vmem:[#allocation8 + $0x8] sm:$0xff]
        %v793 = vld [vmem:[#allocation8 + $0x10] sm:$0xff]
        %v794 = vld [vmem:[#allocation8 + $0x18] sm:$0xff]
        %v795 = vld [vmem:[#allocation8 + $0x20] sm:$0xff]
        %v796 = vld [vmem:[#allocation8 + $0x28] sm:$0xff]
        %v797 = vld [vmem:[#allocation8 + $0x30] sm:$0xff]
        %v798 = vld [vmem:[#allocation8 + $0x38] sm:$0xff]
        %v799 = vld [vmem:[#allocation8 + $0x40] sm:$0xff]
        %v800 = vld [vmem:[#allocation8 + $0x48] sm:$0xff]
        %v801 = vld [vmem:[#allocation8 + $0x50] sm:$0xff]
        %v802 = vld [vmem:[#allocation8 + $0x58] sm:$0xff]
        %v803 = vld [vmem:[#allocation8 + $0x60] sm:$0xff]
        %v804 = vld [vmem:[#allocation8 + $0x68] sm:$0xff]
        %v805 = vld [vmem:[#allocation8 + $0x70] sm:$0xff]
        %v806 = vld [vmem:[#allocation8 + $0x78] sm:$0xff]
        %v807 = vld [vmem:[%s6] sm:$0x1]
        %v809 = vlaneseq
        %v810 = vshrl.u32 %v809, 7
        %v811 = vsub.s32 0, %v810
        %v812 = vrot.slane %v807, %v811
        %814 = vmatprep.subr.mxu0 0.0
        %815 = vmatpush1.msra.mxu0 %v791
        %816 = vmatprep.subr.mxu0 0.0
        %817 = vmatpush1.msra.mxu0 %v792
        %818 = vmatprep.subr.mxu0 0.0
        %819 = vmatpush1.msra.mxu0 %v793
        %820 = vmatprep.subr.mxu0 0.0
        %821 = vmatpush1.msra.mxu0 %v794
        %822 = vmatprep.subr.mxu0 0.0
        %823 = vmatpush1.msra.mxu0 %v795
        %824 = vmatprep.subr.mxu0 0.0
        %825 = vmatpush1.msra.mxu0 %v796
        %826 = vmatprep.subr.mxu0 0.0
        %827 = vmatpush1.msra.mxu0 %v797
        %828 = vmatprep.subr.mxu0 0.0
        %829 = vmatpush1.msra.mxu0 %v798
        %830 = vmatprep.subr.mxu0 0.0
        %831 = vmatpush1.msra.mxu0 %v799
        %832 = vmatprep.subr.mxu0 0.0
        %833 = vmatpush1.msra.mxu0 %v800
        %834 = vmatprep.subr.mxu0 0.0
        %835 = vmatpush1.msra.mxu0 %v801
        %836 = vmatprep.subr.mxu0 0.0
        %837 = vmatpush1.msra.mxu0 %v802
        %838 = vmatprep.subr.mxu0 0.0
        %839 = vmatpush1.msra.mxu0 %v803
        %840 = vmatprep.subr.mxu0 0.0
        %841 = vmatpush1.msra.mxu0 %v804
        %842 = vmatprep.subr.mxu0 0.0
        %843 = vmatpush1.msra.mxu0 %v805
        %844 = vmatprep.subr.mxu0 0.0
        %845 = vmatpush1.msra.mxu0 %v806
        %846 = vmatprep.subr.mxu0 0.0
        %847 = vmatpush1.msra.mxu0 0.0
        %848 = vmatprep.subr.mxu0 0.0
        %849 = vmatpush1.msra.mxu0 0.0
        %850 = vmatprep.subr.mxu0 0.0
        %851 = vmatpush1.msra.mxu0 0.0
        %852 = vmatprep.subr.mxu0 0.0
        %853 = vmatpush1.msra.mxu0 0.0
        %854 = vmatprep.subr.mxu0 0.0
        %855 = vmatpush1.msra.mxu0 0.0
        %856 = vmatprep.subr.mxu0 0.0
        %857 = vmatpush1.msra.mxu0 0.0
        %858 = vmatprep.subr.mxu0 0.0
        %859 = vmatpush1.msra.mxu0 0.0
        %860 = vmatprep.subr.mxu0 0.0
        %861 = vmatpush1.msra.mxu0 0.0
        %862 = vmatprep.subr.mxu0 0.0
        %863 = vmatpush1.msra.mxu0 0.0
        %864 = vmatprep.subr.mxu0 0.0
        %865 = vmatpush1.msra.mxu0 0.0
        %866 = vmatprep.subr.mxu0 0.0
        %867 = vmatpush1.msra.mxu0 0.0
        %868 = vmatprep.subr.mxu0 0.0
        %869 = vmatpush1.msra.mxu0 0.0
        %870 = vmatprep.subr.mxu0 0.0
        %871 = vmatpush1.msra.mxu0 0.0
        %872 = vmatprep.subr.mxu0 0.0
        %873 = vmatpush1.msra.mxu0 0.0
        %874 = vmatprep.subr.mxu0 0.0
        %875 = vmatpush1.msra.mxu0 0.0
        %876 = vmatprep.subr.mxu0 0.0
        %877 = vmatpush1.msra.mxu0 0.0
        %878 = vmatprep.mubr.f32.mxu0 0.0
        %879 = vmatmul.mubr.f32.gmra.mrb[0].mxu0 %v439
        %v880 = vpop.f32.mrb[0].mxu0
        %v881 = vadd.f32 %v812, %v880
        %v882 = vpop.f32.mrb[0].mxu0
        %883 = vmatprep.mubr.f32.mxu0 0.0
        %884 = vmatmul.mubr.f32.gmra.mrb[0].mxu0 %v440
        %v885 = vpop.f32.mrb[0].mxu0
        %v886 = vadd.f32 %v812, %v885
        %v887 = vpop.f32.mrb[0].mxu0
        %888 = vmatprep.mubr.f32.mxu0 0.0
        %889 = vmatmul.mubr.f32.gmra.mrb[0].mxu0 %v441
        %v890 = vpop.f32.mrb[0].mxu0
        %v891 = vadd.f32 %v812, %v890
        %v892 = vpop.f32.mrb[0].mxu0
        %893 = vmatprep.mubr.f32.mxu0 0.0
        %894 = vmatmul.mubr.f32.gmra.mrb[0].mxu0 %v442
        %v895 = vpop.f32.mrb[0].mxu0
        %v896 = vadd.f32 %v812, %v895
        %v897 = vpop.f32.mrb[0].mxu0
        %898 = vmatprep.mubr.f32.mxu0 0.0
        %899 = vmatmul.mubr.f32.gmra.mrb[0].mxu0 %v443
        %v900 = vpop.f32.mrb[0].mxu0
        %v901 = vadd.f32 %v812, %v900
        %v902 = vpop.f32.mrb[0].mxu0
        %903 = vmatprep.mubr.f32.mxu0 0.0
        %904 = vmatmul.mubr.f32.gmra.mrb[0].mxu0 %v444
        %v905 = vpop.f32.mrb[0].mxu0
        %v906 = vadd.f32 %v812, %v905
        %v907 = vpop.f32.mrb[0].mxu0
        %908 = vmatprep.mubr.f32.mxu0 0.0
        %909 = vmatmul.mubr.f32.gmra.mrb[0].mxu0 %v445
        %v910 = vpop.f32.mrb[0].mxu0
        %v911 = vadd.f32 %v812, %v910
        %v912 = vpop.f32.mrb[0].mxu0
        %913 = vmatprep.mubr.f32.mxu0 0.0
        %914 = vmatmul.mubr.f32.gmra.mrb[0].mxu0 %v446
        %v915 = vpop.f32.mrb[0].mxu0
        %v916 = vadd.f32 %v812, %v915
        %v917 = vpop.f32.mrb[0].mxu0
        %918 = vmatprep.mubr.f32.mxu0 0.0
        %919 = vmatmul.mubr.f32.gmra.mrb[0].mxu0 %v447
        %v920 = vpop.f32.mrb[0].mxu0
        %v921 = vadd.f32 %v812, %v920
        %v922 = vpop.f32.mrb[0].mxu0
        %923 = vmatprep.mubr.f32.mxu0 0.0
        %924 = vmatmul.mubr.f32.gmra.mrb[0].mxu0 %v448
        %v925 = vpop.f32.mrb[0].mxu0
        %v926 = vadd.f32 %v812, %v925
        %v927 = vpop.f32.mrb[0].mxu0
        %928 = vmatprep.mubr.f32.mxu0 0.0
        %929 = vmatmul.mubr.f32.gmra.mrb[0].mxu0 %v449
        %v930 = vpop.f32.mrb[0].mxu0
        %v931 = vadd.f32 %v812, %v930
        %v932 = vpop.f32.mrb[0].mxu0
        %933 = vmatprep.mubr.f32.mxu0 0.0
        %934 = vmatmul.mubr.f32.gmra.mrb[0].mxu0 %v450
        %v935 = vpop.f32.mrb[0].mxu0
        %v936 = vadd.f32 %v812, %v935
        %v937 = vpop.f32.mrb[0].mxu0
        %938 = vmatprep.mubr.f32.mxu0 0.0
        %939 = vmatmul.mubr.f32.gmra.mrb[0].mxu0 %v451
        %v940 = vpop.f32.mrb[0].mxu0
        %v941 = vadd.f32 %v812, %v940
        %v942 = vpop.f32.mrb[0].mxu0
        %943 = vmatprep.mubr.f32.mxu0 0.0
        %944 = vmatmul.mubr.f32.gmra.mrb[0].mxu0 %v452
        %v945 = vpop.f32.mrb[0].mxu0
        %v946 = vadd.f32 %v812, %v945
        %v947 = vpop.f32.mrb[0].mxu0
        %948 = vmatprep.mubr.f32.mxu0 0.0
        %949 = vmatmul.mubr.f32.gmra.mrb[0].mxu0 %v453
        %v950 = vpop.f32.mrb[0].mxu0
        %v951 = vadd.f32 %v812, %v950
        %v952 = vpop.f32.mrb[0].mxu0
        %953 = vmatprep.mubr.f32.mxu0 0.0
        %954 = vmatmul.mubr.f32.gmra.mrb[0].mxu0 %v454
        %v955 = vpop.f32.mrb[0].mxu0
        %v956 = vadd.f32 %v812, %v955
        %v957 = vpop.f32.mrb[0].mxu0
        %958 = vdwg.mxu0
        %959 = vst [vmem:[%s420] sm:$0xff] %v545
        %960 = vst [vmem:[%s420 + $0x8] sm:$0xff] %v550
        %961 = vst [vmem:[%s420 + $0x10] sm:$0xff] %v555
        %962 = vst [vmem:[%s420 + $0x18] sm:$0xff] %v560
        %963 = vst [vmem:[%s420 + $0x20] sm:$0xff] %v565
        %964 = vst [vmem:[%s420 + $0x28] sm:$0xff] %v570
        %965 = vst [vmem:[%s420 + $0x30] sm:$0xff] %v575
        %966 = vst [vmem:[%s420 + $0x38] sm:$0xff] %v580
        %967 = vst [vmem:[%s420 + $0x40] sm:$0xff] %v585
        %968 = vst [vmem:[%s420 + $0x48] sm:$0xff] %v590
        %969 = vst [vmem:[%s420 + $0x50] sm:$0xff] %v595
        %970 = vst [vmem:[%s420 + $0x58] sm:$0xff] %v600
        %971 = vst [vmem:[%s420 + $0x60] sm:$0xff] %v605
        %972 = vst [vmem:[%s420 + $0x68] sm:$0xff] %v610
        %973 = vst [vmem:[%s420 + $0x70] sm:$0xff] %v615
        %974 = vst [vmem:[%s420 + $0x78] sm:$0xff] %v620
        %975 = vst [vmem:[%s427] sm:$0xff] %v713
        %976 = vst [vmem:[%s427 + $0x8] sm:$0xff] %v718
        %977 = vst [vmem:[%s427 + $0x10] sm:$0xff] %v723
        %978 = vst [vmem:[%s427 + $0x18] sm:$0xff] %v728
        %979 = vst [vmem:[%s427 + $0x20] sm:$0xff] %v733
        %980 = vst [vmem:[%s427 + $0x28] sm:$0xff] %v738
        %981 = vst [vmem:[%s427 + $0x30] sm:$0xff] %v743
        %982 = vst [vmem:[%s427 + $0x38] sm:$0xff] %v748
        %983 = vst [vmem:[%s427 + $0x40] sm:$0xff] %v753
        %984 = vst [vmem:[%s427 + $0x48] sm:$0xff] %v758
        %985 = vst [vmem:[%s427 + $0x50] sm:$0xff] %v763
        %986 = vst [vmem:[%s427 + $0x58] sm:$0xff] %v768
        %987 = vst [vmem:[%s427 + $0x60] sm:$0xff] %v773
        %988 = vst [vmem:[%s427 + $0x68] sm:$0xff] %v778
        %989 = vst [vmem:[%s427 + $0x70] sm:$0xff] %v783
        %990 = vst [vmem:[%s427 + $0x78] sm:$0xff] %v788
        %991 = vst [vmem:[%s434] sm:$0xff] %v881
        %992 = vst [vmem:[%s434 + $0x8] sm:$0xff] %v886
        %993 = vst [vmem:[%s434 + $0x10] sm:$0xff] %v891
        %994 = vst [vmem:[%s434 + $0x18] sm:$0xff] %v896
        %995 = vst [vmem:[%s434 + $0x20] sm:$0xff] %v901
        %996 = vst [vmem:[%s434 + $0x28] sm:$0xff] %v906
        %997 = vst [vmem:[%s434 + $0x30] sm:$0xff] %v911
        %998 = vst [vmem:[%s434 + $0x38] sm:$0xff] %v916
        %999 = vst [vmem:[%s434 + $0x40] sm:$0xff] %v921
        %1000 = vst [vmem:[%s434 + $0x48] sm:$0xff] %v926
        %1001 = vst [vmem:[%s434 + $0x50] sm:$0xff] %v931
        %1002 = vst [vmem:[%s434 + $0x58] sm:$0xff] %v936
        %1003 = vst [vmem:[%s434 + $0x60] sm:$0xff] %v941
        %1004 = vst [vmem:[%s434 + $0x68] sm:$0xff] %v946
        %1005 = vst [vmem:[%s434 + $0x70] sm:$0xff] %v951
        %1006 = vst [vmem:[%s434 + $0x78] sm:$0xff] %v956
        %s1007 = sand.u32 %s208, 1
        %s1008 = scalar_lea.sflag [#allocation4], %s1007
        %s1009 = sand.u32 %s208, 1
        %s1010 = smul.addr %s1009, 128
        %s1011 = scalar_lea.vmem [#allocation10], %s1010
        %s1012 = sand.u32 %s32, 1
        %s1013 = scalar_lea.sflag [#allocation12], %s1012
        %s1014 = sand.u32 %s236, 1
        %s1015 = smul.addr %s1014, 128
        %s1016 = scalar_lea.vmem [#allocation11], %s1015
        %s1017 = sand.u32 %s32, 1
        %s1018 = scalar_lea.sflag [#allocation12], %s1017
        %s1019 = sand.u32 %s264, 1
        %s1020 = smul.addr %s1019, 128
        %s1021 = scalar_lea.vmem [#allocation13], %s1020
        // Predicated region
        $region65: #{tpu_custom_call.1} parent=47 // pred_check
          %p1022 = pneg %p218
        $region66: #{tpu_custom_call.1} parent=47 // pred_check_branch
          %1024 = sbr.rel (%p1022) target = $region68
        $region67: #{tpu_custom_call.1} parent=47 // pred_region
          %s1025 = smul.u32 16, %s37
          %s1027 = ssub.s32 2048, 2048
          %1028 = vsyncadd %s1008, %s1027
          %s1029 = smul.addr %s36, 32
          %s1030 = sadd.s32 %s1025, %s1029
          %s1031 = smul.addr %s1030, 128
          %s1032 = scalar_lea.hbm %s7, %s1031
          %s1033 = sshll.u32 %s1011, 4
          %s1034 = int_to_ptr.vmem [resolvable:$true] %s1033
          %1039 = dma.vmem_to_hbm [thread:$0]  %s1034, 2048, %s1032, %s1008, 128, 128, 8
        $region68: #{tpu_custom_call.1} parent=47 // pred_fallthru
          _
        // Predicated region
        $region69: #{tpu_custom_call.1} parent=47 // pred_check
          %p1040 = pneg %p246
        $region70: #{tpu_custom_call.1} parent=47 // pred_check_branch
          %1042 = sbr.rel (%p1040) target = $region72
        $region71: #{tpu_custom_call.1} parent=47 // pred_region
          %s1043 = smul.u32 16, %s37
          %s1045 = ssub.s32 2048, 2048
          %1046 = vsyncadd %s1013, %s1045
          %s1047 = smul.addr %s36, 32
          %s1048 = sadd.s32 %s1043, %s1047
          %s1049 = smul.addr %s1048, 128
          %s1050 = scalar_lea.hbm %s8, %s1049
          %s1051 = sshll.u32 %s1016, 4
          %s1052 = int_to_ptr.vmem [resolvable:$true] %s1051
          %1057 = dma.vmem_to_hbm [thread:$0]  %s1052, 2048, %s1050, %s1013, 128, 128, 8
        $region72: #{tpu_custom_call.1} parent=47 // pred_fallthru
          _
        // Predicated region
        $region73: #{tpu_custom_call.1} parent=47 // pred_check
          %p1058 = pneg %p274
        $region74: #{tpu_custom_call.1} parent=47 // pred_check_branch
          %1060 = sbr.rel (%p1058) target = $region76
        $region75: #{tpu_custom_call.1} parent=47 // pred_region
          %s1061 = smul.u32 16, %s37
          %s1063 = ssub.s32 2048, 2048
          %1064 = vsyncadd %s1018, %s1063
          %s1065 = smul.addr %s36, 32
          %s1066 = sadd.s32 %s1061, %s1065
          %s1067 = smul.addr %s1066, 128
          %s1068 = scalar_lea.hbm %s9, %s1067
          %s1069 = sshll.u32 %s1021, 4
          %s1070 = int_to_ptr.vmem [resolvable:$true] %s1069
          %1075 = dma.vmem_to_hbm [thread:$0]  %s1070, 2048, %s1068, %s1018, 128, 128, 8
        $region76: #{tpu_custom_call.1} parent=47 // pred_fallthru
          _
      $region48: #{tpu_custom_call.1} parent=5 // pred_fallthru
        _
      %p1076 = scmp.le.s32.totalorder 2, %s27
      // Predicated region
      $region77: #{tpu_custom_call.1} parent=5 // pred_check
        %p1077 = pneg %p1076
      $region78: #{tpu_custom_call.1} parent=5 // pred_check_branch
        %1079 = sbr.rel (%p1077) target = $region80
      $region79: #{tpu_custom_call.1} parent=5 // pred_region
        %s1080 = ssub.s32 %s27, 2
        // Predicated region
        $region81: #{tpu_custom_call.1} parent=79 // pred_check
          %p1081 = pneg %p224
        $region82: #{tpu_custom_call.1} parent=79 // pred_check_branch
          %1083 = sbr.rel (%p1081) target = $region84
        $region83: #{tpu_custom_call.1} parent=79 // pred_region
          %s1084 = sand.u32 %s209, 1
          %s1085 = scalar_lea.sflag [#allocation4], %s1084
          %s1086 = sand.u32 %s209, 1
          %s1087 = smul.addr %s1086, 128
          %s1088 = scalar_lea.vmem [#allocation10], %s1087
          %1089 = dma.done %s1085, 2048
        $region84: #{tpu_custom_call.1} parent=79 // pred_fallthru
          _
        // Predicated region
        $region85: #{tpu_custom_call.1} parent=79 // pred_check
          %p1090 = pneg %p252
        $region86: #{tpu_custom_call.1} parent=79 // pred_check_branch
          %1092 = sbr.rel (%p1090) target = $region88
        $region87: #{tpu_custom_call.1} parent=79 // pred_region
          %s1093 = sand.u32 %s33, 1
          %s1094 = scalar_lea.sflag [#allocation12], %s1093
          %s1095 = sand.u32 %s237, 1
          %s1096 = smul.addr %s1095, 128
          %s1097 = scalar_lea.vmem [#allocation11], %s1096
          %1098 = dma.done %s1094, 2048
        $region88: #{tpu_custom_call.1} parent=79 // pred_fallthru
          _
        // Predicated region
        $region89: #{tpu_custom_call.1} parent=79 // pred_check
          %p1099 = pneg %p280
        $region90: #{tpu_custom_call.1} parent=79 // pred_check_branch
          %1101 = sbr.rel (%p1099) target = $region92
        $region91: #{tpu_custom_call.1} parent=79 // pred_region
          %s1102 = sand.u32 %s33, 1
          %s1103 = scalar_lea.sflag [#allocation12], %s1102
          %s1104 = sand.u32 %s265, 1
          %s1105 = smul.addr %s1104, 128
          %s1106 = scalar_lea.vmem [#allocation13], %s1105
          %1107 = dma.done %s1103, 2048
        $region92: #{tpu_custom_call.1} parent=79 // pred_fallthru
          _
      $region80: #{tpu_custom_call.1} parent=5 // pred_fallthru
        _
    $region6: #{tpu_custom_call.1} parent=1 // loop_footer
      %s31 = sadd.s32 1, %s27
    $region7: #{tpu_custom_call.1} parent=1 // loop_footer_branch
      %26 = sbr.rel target = $region3
    $region8: #{tpu_custom_call.1} parent=1 // loop_exit
      _
    %1108 = vsyncpa [#allocation3], 1
    %s1109 = scalar_lea.sflag [#allocation3], 1
    %1110 = vsyncpa %s1109, 1
    %1111 = vsyncpa [#allocation6], 1
    %1112 = vsyncpa [#allocation9], 1
    %1113 = vsyncpa [#allocation4], 1
    %s1114 = scalar_lea.sflag [#allocation4], 1
    %1115 = vsyncpa %s1114, 1
    %1116 = vsyncpa [#allocation12], 1
    %s1117 = scalar_lea.sflag [#allocation12], 1
    %1118 = vsyncpa %s1117, 1

</llo_original>
